<compile_context>
chip_gen: v7x
topology: tpu7x:2x2x1
jax: 0.10.0
libtpu: 0.0.40
codegen_flags: <defaults>
</compile_context>

<pallas_src>
import math

import jax
import jax.numpy as jnp
from jax import lax
from jax.experimental import pallas as pl
from jax.experimental.pallas import tpu as pltpu


# --------------------------------------------------------------------------
# Tiling helper: biggest "nice" tile that divides the dim (fall back to the
# full dim, which always satisfies the (8,128) BlockSpec rule).
# --------------------------------------------------------------------------
def _tile(dim, target):
    if dim % target == 0:
        return target
    return dim


# --------------------------------------------------------------------------
# Tiled linear: y = x @ W + b     (x: (M,K), W: (K,N), b: (1,N))
# --------------------------------------------------------------------------
def _linear_kernel(x_ref, w_ref, b_ref, o_ref, acc_ref):
    k = pl.program_id(2)

    @pl.when(k == 0)
    def _init():
        acc_ref[...] = jnp.zeros(acc_ref.shape, acc_ref.dtype)

    acc_ref[...] += jnp.dot(x_ref[...], w_ref[...],
                            preferred_element_type=jnp.float32)

    @pl.when(k == pl.num_programs(2) - 1)
    def _finalize():
        # bias added once per output tile (not per K step)
        o_ref[...] = (acc_ref[...] + b_ref[...]).astype(o_ref.dtype)


def _linear(x2d, w, b, *, tm_target=256, tn_target=256, tk_target=512):
    M, K = x2d.shape
    _, N = w.shape
    tm, tn, tk = _tile(M, tm_target), _tile(N, tn_target), _tile(K, tk_target)
    return pl.pallas_call(
        _linear_kernel,
        out_shape=jax.ShapeDtypeStruct((M, N), x2d.dtype),
        grid_spec=pltpu.PrefetchScalarGridSpec(
            num_scalar_prefetch=0,
            grid=(M // tm, N // tn, K // tk),
            in_specs=[
                pl.BlockSpec((tm, tk), lambda i, j, k: (i, k)),   # x
                pl.BlockSpec((tk, tn), lambda i, j, k: (k, j)),   # W (K-tiled)
                pl.BlockSpec((1, tn), lambda i, j, k: (0, j)),    # bias
            ],
            out_specs=pl.BlockSpec((tm, tn), lambda i, j, k: (i, j)),
            scratch_shapes=[pltpu.VMEM((tm, tn), jnp.float32)],
        ),
        compiler_params=pltpu.CompilerParams(
            dimension_semantics=("parallel", "parallel", "arbitrary"),
            vmem_limit_bytes=64 * 1024 * 1024),
    )(x2d, w, b)


# --------------------------------------------------------------------------
# Flash-style causal attention over (B*H, T, head_dim)
# q already carries the 1/sqrt(head_dim) scale (folded into the projection).
# --------------------------------------------------------------------------
def _flash_attn_kernel(q_ref, k_ref, v_ref, o_ref, m_scr, l_scr, acc_scr):
    qi = pl.program_id(1)
    ki = pl.program_id(2)
    tq = q_ref.shape[1]
    tkv = k_ref.shape[1]

    @pl.when(ki == 0)
    def _init():
        m_scr[...] = jnp.full(m_scr.shape, -jnp.inf, dtype=m_scr.dtype)
        l_scr[...] = jnp.zeros(l_scr.shape, l_scr.dtype)
        acc_scr[...] = jnp.zeros(acc_scr.shape, acc_scr.dtype)

    # Skip kv blocks that lie entirely above the causal diagonal.
    @pl.when(ki * tkv <= qi * tq + (tq - 1))
    def _compute():
        q = q_ref[0]                       # (tq, hd), scale pre-folded
        k = k_ref[0]                       # (tkv, hd)
        v = v_ref[0]                       # (tkv, hd)

        # scores: contract head_dim directly -> no materialized k transpose
        s = lax.dot_general(q, k, (((1,), (1,)), ((), ())),
                            preferred_element_type=jnp.float32)   # (tq, tkv)

        # per-tile causal mask from iota offsets (no full (T,T) mask in VMEM)
        q_pos = qi * tq + lax.broadcasted_iota(jnp.int32, (tq, tkv), 0)
        k_pos = ki * tkv + lax.broadcasted_iota(jnp.int32, (tq, tkv), 1)
        s = jnp.where(k_pos <= q_pos, s, -jnp.inf)

        # online softmax update (all stats kept in f32)
        m_prev = m_scr[...]                                   # (tq, 1)
        m_new = jnp.maximum(m_prev, jnp.max(s, axis=-1, keepdims=True))
        alpha = jnp.exp(m_prev - m_new)                       # (tq, 1)
        p = jnp.exp(s - m_new)                                # (tq, tkv)

        l_scr[...] = alpha * l_scr[...] + jnp.sum(p, axis=-1, keepdims=True)
        acc_scr[...] = alpha * acc_scr[...] + jnp.dot(
            p.astype(v.dtype), v, preferred_element_type=jnp.float32)
        m_scr[...] = m_new

    @pl.when(ki == pl.num_programs(2) - 1)
    def _finalize():
        # single reciprocal-multiply per output tile (approx=True is fine in
        # production; kept exact here to hold the 1e-5 reference tolerance)
        inv_l = pl.reciprocal(l_scr[...], approx=False)
        o_ref[0] = (acc_scr[...] * inv_l).astype(o_ref.dtype)


def _flash_attention(q, k, v, *, tq_target=256, tkv_target=256):
    BH, T, hd = q.shape
    tq = _tile(T, tq_target)
    tkv = _tile(T, tkv_target)
    return pl.pallas_call(
        _flash_attn_kernel,
        out_shape=jax.ShapeDtypeStruct((BH, T, hd), q.dtype),
        grid_spec=pltpu.PrefetchScalarGridSpec(
            num_scalar_prefetch=0,
            grid=(BH, T // tq, T // tkv),
            in_specs=[
                pl.BlockSpec((1, tq, hd), lambda bh, qi, ki: (bh, qi, 0)),
                pl.BlockSpec((1, tkv, hd), lambda bh, qi, ki: (bh, ki, 0)),
                pl.BlockSpec((1, tkv, hd), lambda bh, qi, ki: (bh, ki, 0)),
            ],
            out_specs=pl.BlockSpec((1, tq, hd), lambda bh, qi, ki: (bh, qi, 0)),
            scratch_shapes=[
                pltpu.VMEM((tq, 1), jnp.float32),    # running max m
                pltpu.VMEM((tq, 1), jnp.float32),    # running sum l
                pltpu.VMEM((tq, hd), jnp.float32),   # output accumulator
            ],
        ),
        compiler_params=pltpu.CompilerParams(
            dimension_semantics=("parallel", "parallel", "arbitrary"),
            vmem_limit_bytes=64 * 1024 * 1024),
    )(q, k, v)


# --------------------------------------------------------------------------
# Full module forward
# --------------------------------------------------------------------------
def causal_self_attention(x, params, *, n_head):
    """x: (B, T, C).  params: (C,C) weights in (in,out) layout + (1,C) biases."""
    B, T, C = x.shape
    hd = C // n_head
    scale = 1.0 / math.sqrt(hd)

    # Fuse Q/K/V into one MXU-friendly projection; fold 1/sqrt(hd) into q.
    wqkv = jnp.concatenate(
        [params["wq"] * scale, params["wk"], params["wv"]], axis=1)   # (C, 3C)
    bqkv = jnp.concatenate(
        [params["bq"] * scale, params["bk"], params["bv"]], axis=1)   # (1, 3C)

    x2d = x.reshape(B * T, C)
    qkv = _linear(x2d, wqkv, bqkv)                                    # (B*T, 3C)
    q, k, v = jnp.split(qkv, 3, axis=-1)

    def to_heads(t):   # (B*T, C) -> (B*H, T, hd)
        return (t.reshape(B, T, n_head, hd)
                 .transpose(0, 2, 1, 3)
                 .reshape(B * n_head, T, hd))

    yh = _flash_attention(to_heads(q), to_heads(k), to_heads(v))      # (B*H, T, hd)

    y = (yh.reshape(B, n_head, T, hd)
           .transpose(0, 2, 1, 3)
           .reshape(B * T, C))

    out = _linear(y, params["wp"], params["bp"])                      # (B*T, C)
    return out.reshape(B, T, C)


# --------------------------------------------------------------------------
# Pure-JAX reference mirroring the PyTorch forward pass
# --------------------------------------------------------------------------
def _reference(x, params, *, n_head):
    B, T, C = x.shape
    hd = C // n_head
    q = x @ params["wq"] + params["bq"][0]
    k = x @ params["wk"] + params["bk"][0]
    v = x @ params["wv"] + params["bv"][0]
    q = q.reshape(B, T, n_head, hd).transpose(0, 2, 1, 3)
    k = k.reshape(B, T, n_head, hd).transpose(0, 2, 1, 3)
    v = v.reshape(B, T, n_head, hd).transpose(0, 2, 1, 3)
    att = jnp.einsum("bhtd,bhsd->bhts", q, k) / math.sqrt(hd)
    mask = jnp.tril(jnp.ones((T, T), dtype=bool))
    att = jnp.where(mask, att, -jnp.inf)
    att = jax.nn.softmax(att, axis=-1)
    y = jnp.einsum("bhts,bhsd->bhtd", att, v)
    y = y.transpose(0, 2, 1, 3).reshape(B, T, C)
    return y @ params["wp"] + params["bp"][0]


def _init_params(key, n_embd):
    bound = 1.0 / math.sqrt(n_embd)
    keys = jax.random.split(key, 8)

    def u(k, shape):
        return jax.random.uniform(k, shape, jnp.float32, -bound, bound)

    return {
        "wq": u(keys[0], (n_embd, n_embd)), "bq": u(keys[1], (1, n_embd)),
        "wk": u(keys[2], (n_embd, n_embd)), "bk": u(keys[3], (1, n_embd)),
        "wv": u(keys[4], (n_embd, n_embd)), "bv": u(keys[5], (1, n_embd)),
        "wp": u(keys[6], (n_embd, n_embd)), "bp": u(keys[7], (1, n_embd)),
    }


if __name__ == "__main__":
    B, T, C, n_head = 2, 8, 32, 4          # block_size == T == 8

    root = jax.random.PRNGKey(0)
    kx, kp = jax.random.split(root)
    x = jax.random.normal(kx, (B, T, C), dtype=jnp.float32)
    params = _init_params(kp, C)

    out = causal_self_attention(x, params, n_head=n_head)
    out = jax.block_until_ready(out)

    ref = _reference(x, params, n_head=n_head)
    assert out.shape == (B, T, C)
    assert jnp.allclose(out, ref, atol=1e-5, rtol=1e-5), "mismatch vs reference"

    print("KERNEL_OK")
</pallas_src>

<mosaic_0001>
module attributes {stable_mosaic.version = 11 : i64} {
  func.func @_linear_kernel(%arg0: i32, %arg1: i32, %arg2: i32, %arg3: memref<16x32xf32, #tpu.memory_space<vmem>>, %arg4: memref<32x96xf32, #tpu.memory_space<vmem>>, %arg5: memref<1x96xf32, #tpu.memory_space<vmem>>, %arg6: memref<16x96xf32, #tpu.memory_space<vmem>>, %arg7: memref<16x96xf32, #tpu.memory_space<vmem>>) attributes {dimension_semantics = [#tpu.dimension_semantics<parallel>, #tpu.dimension_semantics<parallel>, #tpu.dimension_semantics<arbitrary>], iteration_bounds = array<i64: 1, 1, 1>, scalar_prefetch = 0 : i64, scratch_operands = 1 : i64, tpu.core_type = #tpu.core_type<tc>, window_params = [{transform_indices = @transform_0, window_bounds = array<i64: 16, 32>}, {transform_indices = @transform_1, window_bounds = array<i64: 32, 96>}, {transform_indices = @transform_2, window_bounds = array<i64: 1, 96>}, {transform_indices = @transform_3, window_bounds = array<i64: 16, 96>}]} {
    %c0_i32 = arith.constant 0 : i32
    %0 = arith.cmpi eq, %arg2, %c0_i32 : i32
    %1 = arith.extui %0 : i1 to i32
    %c0_i32_0 = arith.constant 0 : i32
    %2 = arith.cmpi ne, %1, %c0_i32_0 : i32
    scf.if %2 {
      %cst_10 = arith.constant 0.000000e+00 : f32
      %12 = vector.broadcast %cst_10 : f32 to vector<16x96xf32>
      %c0_11 = arith.constant 0 : index
      %c0_12 = arith.constant 0 : index
      %13 = vector.load %arg7[%c0_11, %c0_12] : memref<16x96xf32, #tpu.memory_space<vmem>>, vector<16x96xf32>
      tpu.vector_store %arg7[%c0_11, %c0_12], %12 {strides = array<i32>} : memref<16x96xf32, #tpu.memory_space<vmem>>, vector<16x96xf32>,
    } else {
    }
    %c0 = arith.constant 0 : index
    %c0_1 = arith.constant 0 : index
    %3 = vector.load %arg7[%c0, %c0_1] : memref<16x96xf32, #tpu.memory_space<vmem>>, vector<16x96xf32>
    %c0_2 = arith.constant 0 : index
    %c0_3 = arith.constant 0 : index
    %4 = vector.load %arg3[%c0_2, %c0_3] : memref<16x32xf32, #tpu.memory_space<vmem>>, vector<16x32xf32>
    %c0_4 = arith.constant 0 : index
    %c0_5 = arith.constant 0 : index
    %5 = vector.load %arg4[%c0_4, %c0_5] : memref<32x96xf32, #tpu.memory_space<vmem>>, vector<32x96xf32>
    %cst = arith.constant dense<0.000000e+00> : vector<16x96xf32>
    %6 = tpu.matmul %4, %5, %cst {dimension_numbers = #tpu.dot_dimension_numbers<[1], [0], [0], [1], [0, 0, 1, 1], [], []>} : vector<16x32xf32>, vector<32x96xf32>, vector<16x96xf32> -> vector<16x96xf32>
    %7 = arith.addf %3, %6 : vector<16x96xf32>
    %c0_6 = arith.constant 0 : index
    %c0_7 = arith.constant 0 : index
    %8 = vector.load %arg7[%c0_6, %c0_7] : memref<16x96xf32, #tpu.memory_space<vmem>>, vector<16x96xf32>
    tpu.vector_store %arg7[%c0_6, %c0_7], %7 {strides = array<i32>} : memref<16x96xf32, #tpu.memory_space<vmem>>, vector<16x96xf32>,
    %c0_i32_8 = arith.constant 0 : i32
    %9 = arith.cmpi eq, %arg2, %c0_i32_8 : i32
    %10 = arith.extui %9 : i1 to i32
    %c0_i32_9 = arith.constant 0 : i32
    %11 = arith.cmpi ne, %10, %c0_i32_9 : i32
    scf.if %11 {
      %c0_10 = arith.constant 0 : index
      %c0_11 = arith.constant 0 : index
      %12 = vector.load %arg7[%c0_10, %c0_11] : memref<16x96xf32, #tpu.memory_space<vmem>>, vector<16x96xf32>
      %c0_12 = arith.constant 0 : index
      %c0_13 = arith.constant 0 : index
      %13 = vector.load %arg5[%c0_12, %c0_13] : memref<1x96xf32, #tpu.memory_space<vmem>>, vector<1x96xf32>
      %14 = vector.broadcast %13 : vector<1x96xf32> to vector<16x96xf32>
      %15 = arith.addf %12, %14 : vector<16x96xf32>
      %c0_14 = arith.constant 0 : index
      %c0_15 = arith.constant 0 : index
      %16 = vector.load %arg6[%c0_14, %c0_15] : memref<16x96xf32, #tpu.memory_space<vmem>>, vector<16x96xf32>
      tpu.vector_store %arg6[%c0_14, %c0_15], %15 {strides = array<i32>} : memref<16x96xf32, #tpu.memory_space<vmem>>, vector<16x96xf32>,
    } else {
    }
    return
  }
  func.func @transform_0(%arg0: i32, %arg1: i32, %arg2: i32) -> (i32, i32) {
    %c0_i32 = arith.constant 0 : i32
    return %arg0, %arg2 : i32, i32
  }
  func.func @transform_1(%arg0: i32, %arg1: i32, %arg2: i32) -> (i32, i32) {
    %c0_i32 = arith.constant 0 : i32
    return %arg2, %arg1 : i32, i32
  }
  func.func @transform_2(%arg0: i32, %arg1: i32, %arg2: i32) -> (i32, i32) {
    %c0_i32 = arith.constant 0 : i32
    %c0_i32_0 = arith.constant 0 : i32
    return %c0_i32, %arg1 : i32, i32
  }
  func.func @transform_3(%arg0: i32, %arg1: i32, %arg2: i32) -> (i32, i32) {
    %c0_i32 = arith.constant 0 : i32
    return %arg0, %arg1 : i32, i32
  }
}

</mosaic_0001>

<llo_original>
// kernel: tpu_custom_call.1
$region0: #{tpu_custom_call.1}
  #allocation0 [shape = 'u32[]', space=smem, size = 0x4, offset = 0x4, fixed_abs, tag = 'smem constant byte address 0x4 - core index']
  #allocation1 [shape = 'u32[144,128]{1,0:T(1,128)}', space=vmem, size = 0x12000, scoped, tag = 'internal scratch']
  #allocation2 [shape = 'f32[16,96]{1,0:T(8,128)}', space=vmem, size = 0x2000, scoped, tag = 'scratch operand']
  %s0 = inlined_call_operand.hbm [shape: f32[16,32], index: 0, kind: input, shape index: {}]
  %s1 = inlined_call_operand.hbm [shape: f32[32,96], index: 1, kind: input, shape index: {}]
  %s2 = inlined_call_operand.hbm [shape: f32[1,96], index: 2, kind: input, shape index: {}]
  %s3 = inlined_call_operand.hbm [shape: f32[16,96], index: 3, kind: output, shape index: {}]
  %s4 = sld [smem:[#allocation0]]
  $region42: #{tpu_custom_call.1} parent=0
    _
  %s6 = ssub.s32 1, %s4
  %s7 = scalar_select 0, %s6, %s4
  $region1: #{tpu_custom_call.1} parent=0
    #allocation3 [shape = 'u8[8192]{0}', space=vmem, size = 0x2000, scoped, tag = 'input window, operand 0, single buffered']
    #allocation4 [shape = 's32[1]{0}', space=sflag, size = 0x4, scoped, tag = 'scoped memory for tpu_custom_call.1']
    #allocation5 [shape = 's32[1]{0}', space=sflag, size = 0x4, scoped, tag = 'scoped memory for tpu_custom_call.1']
    #allocation6 [shape = 'u8[16384]{0}', space=vmem, size = 0x4000, scoped, tag = 'input window, operand 1, single buffered']
    #allocation7 [shape = 's32[1]{0}', space=sflag, size = 0x4, scoped, tag = 'scoped memory for tpu_custom_call.1']
    #allocation8 [shape = 'u8[512]{0}', space=vmem, size = 0x400, scoped, tag = 'input window, operand 2, single buffered']
    #allocation9 [shape = 'u8[8192]{0}', space=vmem, size = 0x2000, scoped, tag = 'output window, operand 0, single buffered']
    %8 = vsyncpa [#allocation4], 0
    %9 = vsyncpa [#allocation7], 0
    %10 = vsyncpa [#allocation5], 0
    // Predicated region
    $region2: #{tpu_custom_call.1} parent=1 // pred_check
      _
    $region3: #{tpu_custom_call.1} parent=1 // pred_check_branch
      %12 = sbr.rel (0) target = $region5
    $region4: #{tpu_custom_call.1} parent=1 // pred_region
      %s14 = ssub.s32 256, 256
      %15 = vsyncadd [#allocation4], %s14
      %s16 = sshll.u32 [#allocation3], 4
      %s17 = int_to_ptr.vmem [resolvable:$true] %s16
      %22 = dma.hbm_to_vmem [thread:$0]  %s0, 256, %s17, [#allocation4], 128, 128, 8
    $region5: #{tpu_custom_call.1} parent=1 // pred_fallthru
      _
    // Predicated region
    $region6: #{tpu_custom_call.1} parent=1 // pred_check
      _
    $region7: #{tpu_custom_call.1} parent=1 // pred_check_branch
      %24 = sbr.rel (0) target = $region9
    $region8: #{tpu_custom_call.1} parent=1 // pred_region
      %s26 = ssub.s32 512, 512
      %27 = vsyncadd [#allocation7], %s26
      %s28 = sshll.u32 [#allocation6], 4
      %s29 = int_to_ptr.vmem [resolvable:$true] %s28
      %34 = dma.hbm_to_vmem [thread:$0]  %s1, 512, %s29, [#allocation7], 128, 128, 8
    $region9: #{tpu_custom_call.1} parent=1 // pred_fallthru
      _
    // Predicated region
    $region10: #{tpu_custom_call.1} parent=1 // pred_check
      _
    $region11: #{tpu_custom_call.1} parent=1 // pred_check_branch
      %36 = sbr.rel (0) target = $region13
    $region12: #{tpu_custom_call.1} parent=1 // pred_region
      %s38 = ssub.s32 16, 16
      %39 = vsyncadd [#allocation7], %s38
      %s41 = sshll.u32 [#allocation8], 4
      %s42 = int_to_ptr.vmem [resolvable:$true] %s41
      %44 = dma.hbm_to_vmem [thread:$0]  %s2, 16, %s42, [#allocation7]
    $region13: #{tpu_custom_call.1} parent=1 // pred_fallthru
      _
    // Predicated region
    $region14: #{tpu_custom_call.1} parent=1 // pred_check
      _
    $region15: #{tpu_custom_call.1} parent=1 // pred_check_branch
      %46 = sbr.rel (0) target = $region17
    $region16: #{tpu_custom_call.1} parent=1 // pred_region
      %47 = dma.done [#allocation4], 256
    $region17: #{tpu_custom_call.1} parent=1 // pred_fallthru
      _
    // Predicated region
    $region18: #{tpu_custom_call.1} parent=1 // pred_check
      _
    $region19: #{tpu_custom_call.1} parent=1 // pred_check_branch
      %49 = sbr.rel (0) target = $region21
    $region20: #{tpu_custom_call.1} parent=1 // pred_region
      %50 = dma.done [#allocation7], 512
    $region21: #{tpu_custom_call.1} parent=1 // pred_fallthru
      _
    // Predicated region
    $region22: #{tpu_custom_call.1} parent=1 // pred_check
      _
    $region23: #{tpu_custom_call.1} parent=1 // pred_check_branch
      %52 = sbr.rel (0) target = $region25
    $region24: #{tpu_custom_call.1} parent=1 // pred_region
      %53 = dma.done [#allocation7], 16
    $region25: #{tpu_custom_call.1} parent=1 // pred_fallthru
      _
    %p54 = scmp.eq.s32.totalorder 0, 0
    // Predicated region
    $region26: #{tpu_custom_call.1} parent=1 // pred_check
      %p55 = pneg %p54
    $region27: #{tpu_custom_call.1} parent=1 // pred_check_branch
      %57 = sbr.rel (%p55) target = $region29
    $region28: #{tpu_custom_call.1} parent=1 // pred_region
      %vm58 = vcmask 785408
      %59 = vst.msk [vmem:[#allocation2] sm:$0xff] %vm58, 0.0
      %60 = vst.msk [vmem:[#allocation2 + $0x8] sm:$0xff] %vm58, 0.0
    $region29: #{tpu_custom_call.1} parent=1 // pred_fallthru
      _
    %v61 = vld [vmem:[#allocation2] sm:$0xff]
    %v62 = vld [vmem:[#allocation2 + $0x8] sm:$0xff]
    %v63 = vld [vmem:[#allocation3] sm:$0xff]
    %v64 = vld [vmem:[#allocation3 + $0x8] sm:$0xff]
    %v65 = vld [vmem:[#allocation6] sm:$0xff]
    %v66 = vld [vmem:[#allocation6 + $0x8] sm:$0xff]
    %v67 = vld [vmem:[#allocation6 + $0x10] sm:$0xff]
    %v68 = vld [vmem:[#allocation6 + $0x18] sm:$0xff]
    %vm69 = vcmask 261120
    %v71 = vsel %vm69, %v63, 0
    %v74 = vsel %vm69, %v64, 0
    %76 = vmatprep.subr.mxu0 0.0
    %77 = vmatpush1.msra.mxu0 %v65
    %78 = vmatprep.subr.mxu0 0.0
    %79 = vmatpush1.msra.mxu0 %v66
    %80 = vmatprep.subr.mxu0 0.0
    %81 = vmatpush1.msra.mxu0 %v67
    %82 = vmatprep.subr.mxu0 0.0
    %83 = vmatpush1.msra.mxu0 %v68
    %84 = vmatprep.subr.mxu0 0.0
    %85 = vmatpush1.msra.mxu0 0.0
    %86 = vmatprep.subr.mxu0 0.0
    %87 = vmatpush1.msra.mxu0 0.0
    %88 = vmatprep.subr.mxu0 0.0
    %89 = vmatpush1.msra.mxu0 0.0
    %90 = vmatprep.subr.mxu0 0.0
    %91 = vmatpush1.msra.mxu0 0.0
    %92 = vmatprep.subr.mxu0 0.0
    %93 = vmatpush1.msra.mxu0 0.0
    %94 = vmatprep.subr.mxu0 0.0
    %95 = vmatpush1.msra.mxu0 0.0
    %96 = vmatprep.subr.mxu0 0.0
    %97 = vmatpush1.msra.mxu0 0.0
    %98 = vmatprep.subr.mxu0 0.0
    %99 = vmatpush1.msra.mxu0 0.0
    %100 = vmatprep.subr.mxu0 0.0
    %101 = vmatpush1.msra.mxu0 0.0
    %102 = vmatprep.subr.mxu0 0.0
    %103 = vmatpush1.msra.mxu0 0.0
    %104 = vmatprep.subr.mxu0 0.0
    %105 = vmatpush1.msra.mxu0 0.0
    %106 = vmatprep.subr.mxu0 0.0
    %107 = vmatpush1.msra.mxu0 0.0
    %108 = vmatprep.subr.mxu0 0.0
    %109 = vmatpush1.msra.mxu0 0.0
    %110 = vmatprep.subr.mxu0 0.0
    %111 = vmatpush1.msra.mxu0 0.0
    %112 = vmatprep.subr.mxu0 0.0
    %113 = vmatpush1.msra.mxu0 0.0
    %114 = vmatprep.subr.mxu0 0.0
    %115 = vmatpush1.msra.mxu0 0.0
    %116 = vmatprep.subr.mxu0 0.0
    %117 = vmatpush1.msra.mxu0 0.0
    %118 = vmatprep.subr.mxu0 0.0
    %119 = vmatpush1.msra.mxu0 0.0
    %120 = vmatprep.subr.mxu0 0.0
    %121 = vmatpush1.msra.mxu0 0.0
    %122 = vmatprep.subr.mxu0 0.0
    %123 = vmatpush1.msra.mxu0 0.0
    %124 = vmatprep.subr.mxu0 0.0
    %125 = vmatpush1.msra.mxu0 0.0
    %126 = vmatprep.subr.mxu0 0.0
    %127 = vmatpush1.msra.mxu0 0.0
    %128 = vmatprep.subr.mxu0 0.0
    %129 = vmatpush1.msra.mxu0 0.0
    %130 = vmatprep.subr.mxu0 0.0
    %131 = vmatpush1.msra.mxu0 0.0
    %132 = vmatprep.subr.mxu0 0.0
    %133 = vmatpush1.msra.mxu0 0.0
    %134 = vmatprep.subr.mxu0 0.0
    %135 = vmatpush1.msra.mxu0 0.0
    %136 = vmatprep.subr.mxu0 0.0
    %137 = vmatpush1.msra.mxu0 0.0
    %138 = vmatprep.subr.mxu0 0.0
    %139 = vmatpush1.msra.mxu0 0.0
    %140 = vmatprep.mubr.f32.mxu0 0.0
    %141 = vmatmul.mubr.f32.gmra.mrb[0].mxu0 %v71
    %v142 = vpop.f32.mrb[0].mxu0
    %v143 = vadd.f32 0.0, %v142
    %v144 = vpop.f32.mrb[0].mxu0
    %145 = vmatprep.mubr.f32.mxu0 0.0
    %146 = vmatmul.mubr.f32.gmra.mrb[0].mxu0 %v74
    %v147 = vpop.f32.mrb[0].mxu0
    %v148 = vadd.f32 0.0, %v147
    %v149 = vpop.f32.mrb[0].mxu0
    %150 = vdwg.mxu0
    %v151 = vadd.f32 %v61, %v143
    %v152 = vadd.f32 %v62, %v148
    %vm153 = vcmask 785408
    %154 = vst.msk [vmem:[#allocation2] sm:$0xff] %vm153, %v151
    %155 = vst.msk [vmem:[#allocation2 + $0x8] sm:$0xff] %vm153, %v152
    // Predicated region
    $region30: #{tpu_custom_call.1} parent=1 // pred_check
      %p156 = pneg %p54
    $region31: #{tpu_custom_call.1} parent=1 // pred_check_branch
      %158 = sbr.rel (%p156) target = $region33
    $region32: #{tpu_custom_call.1} parent=1 // pred_region
      %v159 = vld [vmem:[#allocation2] sm:$0xff]
      %v160 = vld [vmem:[#allocation2 + $0x8] sm:$0xff]
      %v161 = vld [vmem:[#allocation8] sm:$0x1]
      %v163 = vlaneseq
      %v164 = vshrl.u32 %v163, 7
      %v165 = vsub.s32 0, %v164
      %v166 = vrot.slane %v161, %v165
      %v168 = vadd.f32 %v159, %v166
      %v169 = vadd.f32 %v160, %v166
      %170 = vst.msk [vmem:[#allocation9] sm:$0xff] %vm153, %v168
      %171 = vst.msk [vmem:[#allocation9 + $0x8] sm:$0xff] %vm153, %v169
    $region33: #{tpu_custom_call.1} parent=1 // pred_fallthru
      _
    // Predicated region
    $region34: #{tpu_custom_call.1} parent=1 // pred_check
      _
    $region35: #{tpu_custom_call.1} parent=1 // pred_check_branch
      %173 = sbr.rel (0) target = $region37
    $region36: #{tpu_custom_call.1} parent=1 // pred_region
      %s175 = ssub.s32 256, 256
      %176 = vsyncadd [#allocation5], %s175
      %s177 = sshll.u32 [#allocation9], 4
      %s178 = int_to_ptr.vmem [resolvable:$true] %s177
      %183 = dma.vmem_to_hbm [thread:$0]  %s178, 256, %s3, [#allocation5], 128, 128, 8
    $region37: #{tpu_custom_call.1} parent=1 // pred_fallthru
      _
    // Predicated region
    $region38: #{tpu_custom_call.1} parent=1 // pred_check
      _
    $region39: #{tpu_custom_call.1} parent=1 // pred_check_branch
      %185 = sbr.rel (0) target = $region41
    $region40: #{tpu_custom_call.1} parent=1 // pred_region
      %186 = dma.done [#allocation5], 256
    $region41: #{tpu_custom_call.1} parent=1 // pred_fallthru
      _
    %187 = vsyncpa [#allocation4], 1
    %188 = vsyncpa [#allocation7], 1
    %189 = vsyncpa [#allocation5], 1

</llo_original>
